<compile_context>
chip_gen: v7x
topology: tpu7x:2x2x1
jax: 0.10.0
libtpu: 0.0.40
codegen_flags: <defaults>
</compile_context>

<pallas_src>
import functools

import jax
import jax.numpy as jnp
from jax import lax
from jax.experimental import pallas as pl
from jax.experimental.pallas import tpu as pltpu


# Operating points that are safe across v5e / v6e / v7x:
#   * total scoped VMEM kept <= ~48 MiB (v7x only has 64 MiB physical/TC);
#   * per-step x DMA targeted at ~6 MiB (amortizes per-step overhead at
#     v7x's ~3.2 TB/s; also comfortably above v6e/v5e targets);
#   * lane-fold unroll capped at 64 slices (hw_chunk <= 8192 elements).
_VMEM_BUDGET = 48 << 20
_TARGET_STEP_BYTES = 6 << 20
_MAX_CHUNK_ELEMS = 64 * 128


def _cag_kernel(x_ref, w1_ref, b1_ref, w2_ref, b2_ref, out_ref, acc_ref, *,
                inv_hw, hw_total, hw_chunk, fold, needs_mask):
    """One (batch-tile, spatial-chunk) grid step of the SE gate.

    grid = (B_tiles, HW_chunks); spatial chunk axis is the (last) reduction axis.
    acc_ref:
      fold=True : (b_tile, C, 128) f32 - per-step lane-aligned partial sums
                  (VALU adds only); the single cross-lane reduce happens in
                  the k==last finalize.
      fold=False: (b_tile, C) f32 - direct lane reduce (only used when the
                  whole ragged HW is a single full-dim chunk).
    """
    k = pl.program_id(1)

    @pl.when(k == 0)
    def _():
        acc_ref[...] = jnp.zeros_like(acc_ref)

    x = x_ref[...]                                   # (b_tile, C, hw_chunk)

    if needs_mask:
        # The tail of the last (partial) spatial block holds undefined data:
        # zero it before summing.  Statically omitted when HW % hw_chunk == 0.
        lane = lax.broadcasted_iota(jnp.int32, x.shape, 2)
        valid = (k * hw_chunk + lane) < hw_total
        x = jnp.where(valid, x, jnp.zeros_like(x))

    if fold:
        # Fold the chunk onto 128 lanes with elementwise (VALU) adds of
        # native 128-lane slices: no relayout, no per-step XLU reduce.
        s = x[:, :, 0:128].astype(jnp.float32)
        for j in range(1, hw_chunk // 128):
            s = s + x[:, :, j * 128:(j + 1) * 128].astype(jnp.float32)
        acc_ref[...] += s
    else:
        acc_ref[...] += jnp.sum(x, axis=-1, dtype=jnp.float32)

    # Finalize ONCE per output tile: mean scale + tiny SE MLP + store.
    @pl.when(k == pl.num_programs(1) - 1)
    def _():
        if fold:
            y = jnp.sum(acc_ref[...], axis=-1) * inv_hw      # (b_tile, C)
        else:
            y = acc_ref[...] * inv_hw                        # (b_tile, C)
        h = jnp.dot(y, w1_ref[...],
                    preferred_element_type=jnp.float32) + b1_ref[...]
        h = jnp.maximum(h, 0.0)                              # ReLU
        o = jnp.dot(h, w2_ref[...],
                    preferred_element_type=jnp.float32) + b2_ref[...]
        o = jax.nn.sigmoid(o)                                # (b_tile, C)
        out_ref[...] = o[:, None, :].astype(out_ref.dtype)   # (b_tile, 1, C)


def _largest_divisor_leq(n, cap):
    cap = max(1, min(int(cap), int(n)))
    for d in range(cap, 0, -1):
        if n % d == 0:
            return d
    return 1


def channel_attention_gate(x_nchw, w1_t, b1, w2_t, b2, *,
                           hw_chunk=None, b_tile=None):
    """SE-style channel gate.

    x_nchw: (B, C, H, W).  w1_t: (C, hidden), b1: (1, hidden),
    w2_t: (hidden, C), b2: (1, C)  (PyTorch Linear weights transposed).
    Returns the sigmoid gate of shape (B, C, 1, 1).
    """
    B, C, H, W = x_nchw.shape
    HW = H * W
    hidden = w1_t.shape[1]
    itemsize = jnp.dtype(x_nchw.dtype).itemsize

    # No spatial padding: the tail is masked inside the kernel.
    x_flat = x_nchw.reshape(B, C, HW)

    # Conservatively assume every operand is double-buffered.
    param_bytes = 2 * sum(int(a.size) * jnp.dtype(a.dtype).itemsize
                          for a in (w1_t, b1, w2_t, b2))

    # ---- batch tile: largest divisor of B that is <= 8 and leaves >= 2
    # batch programs when B >= 2 (so both v7x TensorCores get work). ----
    if b_tile is None:
        cap = 1 if B < 2 else min(8, B // 2)
        b_tile = _largest_divisor_leq(B, cap)
    else:
        b_tile = _largest_divisor_leq(B, b_tile)

    def _min_footprint(bt):
        row = bt * C * itemsize
        return (2 * row * min(HW, 128) + param_bytes
                + bt * C * 128 * 4 + 2 * bt * C * itemsize)

    while b_tile > 1 and _min_footprint(b_tile) > _VMEM_BUDGET:
        b_tile = _largest_divisor_leq(B, b_tile - 1)

    row_bytes = b_tile * C * itemsize              # bytes per spatial element
    acc_hi = b_tile * C * 128 * 4                  # worst-case accumulator
    out_bytes = 2 * b_tile * C * itemsize
    max_block_bytes = max((_VMEM_BUDGET - param_bytes - acc_hi - out_bytes) // 2,
                          row_bytes * min(HW, 128))

    # ---- spatial chunk: whole HW if it fits (one contiguous DMA run per
    # (b, c) row, single reduction step, no masking); otherwise a lane-dense
    # 128-multiple sized for >= ~6 MiB per step within the VMEM budget. ----
    if hw_chunk is None:
        if HW <= _MAX_CHUNK_ELEMS and HW * row_bytes <= max_block_bytes:
            hw_chunk = HW
        else:
            want = max(_TARGET_STEP_BYTES // row_bytes, 128)
            cap = max(max_block_bytes // row_bytes, 128)
            hw_chunk = int(min(want, cap, _MAX_CHUNK_ELEMS))
            hw_chunk = max(128, (hw_chunk // 128) * 128)
            hw_chunk = min(hw_chunk, HW)
    else:
        hw_chunk = int(min(hw_chunk, HW))
        if hw_chunk < HW:
            hw_chunk = max(128, (hw_chunk // 128) * 128)
            hw_chunk = min(hw_chunk, HW)

    fold = (hw_chunk % 128 == 0)
    needs_mask = (HW % hw_chunk != 0)
    num_k = (HW + hw_chunk - 1) // hw_chunk
    grid = (B // b_tile, num_k)

    acc_shape = (b_tile, C, 128) if fold else (b_tile, C)
    x_block_bytes = b_tile * C * hw_chunk * itemsize
    acc_bytes = (b_tile * C * 128 * 4) if fold else (b_tile * C * 4)
    required = 2 * x_block_bytes + param_bytes + acc_bytes + out_bytes
    vmem_limit = int(max(32 << 20, required + (4 << 20)))

    cost = pl.CostEstimate(
        flops=int(B * C * HW + 4 * B * C * hidden),
        transcendentals=int(B * C),
        bytes_accessed=int(B * C * HW * itemsize
                           + sum(int(a.size) * jnp.dtype(a.dtype).itemsize
                                 for a in (w1_t, b1, w2_t, b2))
                           + B * C * itemsize),
    )

    kernel = functools.partial(
        _cag_kernel,
        inv_hw=1.0 / float(HW),
        hw_total=HW,
        hw_chunk=hw_chunk,
        fold=fold,
        needs_mask=needs_mask,
    )

    out = pl.pallas_call(
        kernel,
        out_shape=jax.ShapeDtypeStruct((B, 1, C), x_nchw.dtype),
        grid_spec=pltpu.PrefetchScalarGridSpec(
            num_scalar_prefetch=0,
            grid=grid,
            in_specs=[
                # x: tiled over batch and spatial; spatial is the reduction.
                pl.BlockSpec((b_tile, C, hw_chunk), lambda b, k: (b, 0, k)),
                # MLP params: VMEM-resident across the whole grid.
                pl.BlockSpec((C, hidden), lambda b, k: (0, 0)),
                pl.BlockSpec((1, hidden), lambda b, k: (0, 0)),
                pl.BlockSpec((hidden, C), lambda b, k: (0, 0)),
                pl.BlockSpec((1, C), lambda b, k: (0, 0)),
            ],
            # Same output block across the reduction axis => stays resident.
            out_specs=pl.BlockSpec((b_tile, 1, C), lambda b, k: (b, 0, 0)),
            scratch_shapes=[pltpu.VMEM(acc_shape, jnp.float32)],
        ),
        compiler_params=pltpu.CompilerParams(
            dimension_semantics=("parallel", "arbitrary"),
            vmem_limit_bytes=vmem_limit,
        ),
        cost_estimate=cost,
    )(x_flat, w1_t, b1, w2_t, b2)

    return out.reshape(B, C, 1, 1)


if __name__ == "__main__":
    # Small shapes consistent with the module: reduction=16 needs C >= 16.
    B, C = 2, 32
    reduction = 16
    hidden = C // reduction  # 2

    key = jax.random.PRNGKey(0)
    kx, k1, k2, k3, k4 = jax.random.split(key, 5)

    # PyTorch Linear stores weight as (out, in); we pass transposed (in, out).
    w1_t = jax.random.normal(k1, (C, hidden), dtype=jnp.float32) * 0.1
    b1 = jax.random.normal(k2, (1, hidden), dtype=jnp.float32) * 0.1
    w2_t = jax.random.normal(k3, (hidden, C), dtype=jnp.float32) * 0.1
    b2 = jax.random.normal(k4, (1, C), dtype=jnp.float32) * 0.1

    def ref_gate(x):
        y = jnp.mean(x, axis=(2, 3))                           # (B, C)
        h = jnp.maximum(y @ w1_t + b1, 0.0)
        return jax.nn.sigmoid(h @ w2_t + b2).reshape(x.shape[0], x.shape[1], 1, 1)

    # 1) Auto-tiled path: HW=256 is a 128-multiple -> single full-HW chunk,
    #    lane-fold accumulator, no masking.
    x = jax.random.normal(kx, (B, C, 16, 16), dtype=jnp.float32)
    gate = channel_attention_gate(x, w1_t, b1, w2_t, b2)
    jax.block_until_ready(gate)
    assert gate.shape == (B, C, 1, 1)
    assert jnp.allclose(gate, ref_gate(x), atol=1e-5, rtol=1e-5)

    # 2) Ragged spatial extent (HW=208), auto path: single full-dim chunk,
    #    direct reduce, no pad and no mask needed.
    x2 = jax.random.normal(kx, (B, C, 16, 13), dtype=jnp.float32)
    gate2 = channel_attention_gate(x2, w1_t, b1, w2_t, b2)
    jax.block_until_ready(gate2)
    assert jnp.allclose(gate2, ref_gate(x2), atol=1e-5, rtol=1e-5)

    # 3) Forced small chunk on the ragged input: exercises the multi-step
    #    reduction pipeline AND the in-kernel tail masking (no wrapper pad).
    gate3 = channel_attention_gate(x2, w1_t, b1, w2_t, b2, hw_chunk=128)
    jax.block_until_ready(gate3)
    assert jnp.allclose(gate3, ref_gate(x2), atol=1e-5, rtol=1e-5)

    print("KERNEL_OK")
</pallas_src>

<mosaic_0001>
module attributes {stable_mosaic.version = 11 : i64} {
  func.func @_cag_kernel(%arg0: i32, %arg1: i32, %arg2: memref<1x32x256xf32, #tpu.memory_space<vmem>>, %arg3: memref<32x2xf32, #tpu.memory_space<vmem>>, %arg4: memref<1x2xf32, #tpu.memory_space<vmem>>, %arg5: memref<2x32xf32, #tpu.memory_space<vmem>>, %arg6: memref<1x32xf32, #tpu.memory_space<vmem>>, %arg7: memref<1x1x32xf32, #tpu.memory_space<vmem>>, %arg8: memref<1x32x128xf32, #tpu.memory_space<vmem>>) attributes {dimension_semantics = [#tpu.dimension_semantics<parallel>, #tpu.dimension_semantics<arbitrary>], iteration_bounds = array<i64: 2, 1>, scalar_prefetch = 0 : i64, scratch_operands = 1 : i64, tpu.core_type = #tpu.core_type<tc>, window_params = [{transform_indices = @transform_0, window_bounds = array<i64: 1, 32, 256>}, {pipeline_mode = #tpu.pipeline_mode<synchronous>, transform_indices = @transform_1, window_bounds = array<i64: 32, 2>}, {pipeline_mode = #tpu.pipeline_mode<synchronous>, transform_indices = @transform_2, window_bounds = array<i64: 1, 2>}, {pipeline_mode = #tpu.pipeline_mode<synchronous>, transform_indices = @transform_3, window_bounds = array<i64: 2, 32>}, {pipeline_mode = #tpu.pipeline_mode<synchronous>, transform_indices = @transform_4, window_bounds = array<i64: 1, 32>}, {transform_indices = @transform_5, window_bounds = array<i64: 1, 1, 32>}]} {
    %c0_i32 = arith.constant 0 : i32
    %0 = arith.cmpi eq, %arg1, %c0_i32 : i32
    %1 = arith.extui %0 : i1 to i32
    %c0_i32_0 = arith.constant 0 : i32
    %2 = arith.cmpi ne, %1, %c0_i32_0 : i32
    scf.if %2 {
      %cst = arith.constant 0.000000e+00 : f32
      %13 = vector.broadcast %cst : f32 to vector<1x32x128xf32>
      %c0_11 = arith.constant 0 : index
      %c0_12 = arith.constant 0 : index
      %c0_13 = arith.constant 0 : index
      %14 = vector.load %arg8[%c0_11, %c0_12, %c0_13] : memref<1x32x128xf32, #tpu.memory_space<vmem>>, vector<1x32x128xf32>
      tpu.vector_store %arg8[%c0_11, %c0_12, %c0_13], %13 {strides = array<i32>} : memref<1x32x128xf32, #tpu.memory_space<vmem>>, vector<1x32x128xf32>,
    } else {
    }
    %c0 = arith.constant 0 : index
    %c0_1 = arith.constant 0 : index
    %c0_2 = arith.constant 0 : index
    %3 = vector.load %arg2[%c0, %c0_1, %c0_2] : memref<1x32x256xf32, #tpu.memory_space<vmem>>, vector<1x32x256xf32>
    %4 = vector.extract_strided_slice %3 {offsets = [0, 0, 0], sizes = [1, 32, 128], strides = [1, 1, 1]} : vector<1x32x256xf32> to vector<1x32x128xf32>
    %5 = vector.extract_strided_slice %3 {offsets = [0, 0, 128], sizes = [1, 32, 128], strides = [1, 1, 1]} : vector<1x32x256xf32> to vector<1x32x128xf32>
    %6 = arith.addf %4, %5 : vector<1x32x128xf32>
    %c0_3 = arith.constant 0 : index
    %c0_4 = arith.constant 0 : index
    %c0_5 = arith.constant 0 : index
    %7 = vector.load %arg8[%c0_3, %c0_4, %c0_5] : memref<1x32x128xf32, #tpu.memory_space<vmem>>, vector<1x32x128xf32>
    %8 = arith.addf %7, %6 : vector<1x32x128xf32>
    %c0_6 = arith.constant 0 : index
    %c0_7 = arith.constant 0 : index
    %c0_8 = arith.constant 0 : index
    %9 = vector.load %arg8[%c0_6, %c0_7, %c0_8] : memref<1x32x128xf32, #tpu.memory_space<vmem>>, vector<1x32x128xf32>
    tpu.vector_store %arg8[%c0_6, %c0_7, %c0_8], %8 {strides = array<i32>} : memref<1x32x128xf32, #tpu.memory_space<vmem>>, vector<1x32x128xf32>,
    %c0_i32_9 = arith.constant 0 : i32
    %10 = arith.cmpi eq, %arg1, %c0_i32_9 : i32
    %11 = arith.extui %10 : i1 to i32
    %c0_i32_10 = arith.constant 0 : i32
    %12 = arith.cmpi ne, %11, %c0_i32_10 : i32
    scf.if %12 {
      %c0_11 = arith.constant 0 : index
      %c0_12 = arith.constant 0 : index
      %c0_13 = arith.constant 0 : index
      %13 = vector.load %arg8[%c0_11, %c0_12, %c0_13] : memref<1x32x128xf32, #tpu.memory_space<vmem>>, vector<1x32x128xf32>
      %cst = arith.constant dense<0.000000e+00> : vector<1x32xf32>
      %14 = vector.multi_reduction <add>, %13, %cst [2] : vector<1x32x128xf32> to vector<1x32xf32>
      %cst_14 = arith.constant 3.906250e-03 : f32
      %15 = vector.broadcast %cst_14 : f32 to vector<1x32xf32>
      %16 = arith.mulf %14, %15 : vector<1x32xf32>
      %c0_15 = arith.constant 0 : index
      %c0_16 = arith.constant 0 : index
      %17 = vector.load %arg3[%c0_15, %c0_16] : memref<32x2xf32, #tpu.memory_space<vmem>>, vector<32x2xf32>
      %cst_17 = arith.constant dense<0.000000e+00> : vector<1x2xf32>
      %18 = tpu.matmul %16, %17, %cst_17 {dimension_numbers = #tpu.dot_dimension_numbers<[1], [0], [0], [1], [0, 0, 1, 1], [], []>} : vector<1x32xf32>, vector<32x2xf32>, vector<1x2xf32> -> vector<1x2xf32>
      %c0_18 = arith.constant 0 : index
      %c0_19 = arith.constant 0 : index
      %19 = vector.load %arg4[%c0_18, %c0_19] : memref<1x2xf32, #tpu.memory_space<vmem>>, vector<1x2xf32>
      %20 = arith.addf %18, %19 : vector<1x2xf32>
      %cst_20 = arith.constant 0.000000e+00 : f32
      %21 = vector.broadcast %cst_20 : f32 to vector<1x2xf32>
      %22 = arith.maximumf %20, %21 : vector<1x2xf32>
      %c0_21 = arith.constant 0 : index
      %c0_22 = arith.constant 0 : index
      %23 = vector.load %arg5[%c0_21, %c0_22] : memref<2x32xf32, #tpu.memory_space<vmem>>, vector<2x32xf32>
      %cst_23 = arith.constant dense<0.000000e+00> : vector<1x32xf32>
      %24 = tpu.matmul %22, %23, %cst_23 {dimension_numbers = #tpu.dot_dimension_numbers<[1], [0], [0], [1], [0, 0, 1, 1], [], []>} : vector<1x2xf32>, vector<2x32xf32>, vector<1x32xf32> -> vector<1x32xf32>
      %c0_24 = arith.constant 0 : index
      %c0_25 = arith.constant 0 : index
      %25 = vector.load %arg6[%c0_24, %c0_25] : memref<1x32xf32, #tpu.memory_space<vmem>>, vector<1x32xf32>
      %26 = arith.addf %24, %25 : vector<1x32xf32>
      %27 = arith.negf %26 : vector<1x32xf32>
      %28 = math.exp %27 : vector<1x32xf32>
      %cst_26 = arith.constant 1.000000e+00 : f32
      %29 = vector.broadcast %cst_26 : f32 to vector<1x32xf32>
      %30 = arith.addf %29, %28 : vector<1x32xf32>
      %31 = arith.divf %29, %30 : vector<1x32xf32>
      %32 = vector.shape_cast %31 : vector<1x32xf32> to vector<1x1x32xf32>
      %c0_27 = arith.constant 0 : index
      %c0_28 = arith.constant 0 : index
      %c0_29 = arith.constant 0 : index
      %33 = vector.load %arg7[%c0_27, %c0_28, %c0_29] : memref<1x1x32xf32, #tpu.memory_space<vmem>>, vector<1x1x32xf32>
      tpu.vector_store %arg7[%c0_27, %c0_28, %c0_29], %32 {strides = array<i32>} : memref<1x1x32xf32, #tpu.memory_space<vmem>>, vector<1x1x32xf32>,
    } else {
    }
    return
  }
  func.func @transform_0(%arg0: i32, %arg1: i32) -> (i32, i32, i32) {
    %c0_i32 = arith.constant 0 : i32
    %c0_i32_0 = arith.constant 0 : i32
    return %arg0, %c0_i32, %arg1 : i32, i32, i32
  }
  func.func @transform_1(%arg0: i32, %arg1: i32) -> (i32, i32) {
    %c0_i32 = arith.constant 0 : i32
    %c0_i32_0 = arith.constant 0 : i32
    %c0_i32_1 = arith.constant 0 : i32
    return %c0_i32, %c0_i32_0 : i32, i32
  }
  func.func @transform_2(%arg0: i32, %arg1: i32) -> (i32, i32) {
    %c0_i32 = arith.constant 0 : i32
    %c0_i32_0 = arith.constant 0 : i32
    %c0_i32_1 = arith.constant 0 : i32
    return %c0_i32, %c0_i32_0 : i32, i32
  }
  func.func @transform_3(%arg0: i32, %arg1: i32) -> (i32, i32) {
    %c0_i32 = arith.constant 0 : i32
    %c0_i32_0 = arith.constant 0 : i32
    %c0_i32_1 = arith.constant 0 : i32
    return %c0_i32, %c0_i32_0 : i32, i32
  }
  func.func @transform_4(%arg0: i32, %arg1: i32) -> (i32, i32) {
    %c0_i32 = arith.constant 0 : i32
    %c0_i32_0 = arith.constant 0 : i32
    %c0_i32_1 = arith.constant 0 : i32
    return %c0_i32, %c0_i32_0 : i32, i32
  }
  func.func @transform_5(%arg0: i32, %arg1: i32) -> (i32, i32, i32) {
    %c0_i32 = arith.constant 0 : i32
    %c0_i32_0 = arith.constant 0 : i32
    %c0_i32_1 = arith.constant 0 : i32
    return %arg0, %c0_i32, %c0_i32_0 : i32, i32, i32
  }
}

</mosaic_0001>

<llo_original>
// kernel: tpu_custom_call.1
$region0: #{tpu_custom_call.1}
  #allocation0 [shape = 'u32[]', space=smem, size = 0x4, offset = 0x4, fixed_abs, tag = 'smem constant byte address 0x4 - core index']
  #allocation1 [shape = 'u32[144,128]{1,0:T(1,128)}', space=vmem, size = 0x12000, scoped, tag = 'internal scratch']
  #allocation2 [shape = 'f32[1,32,128]{2,1,0:T(8,128)}', space=vmem, size = 0x4000, scoped, tag = 'scratch operand']
  %s0 = inlined_call_operand.hbm [shape: f32[2,32,256], index: 0, kind: input, shape index: {}]
  %s1 = inlined_call_operand.vmem [shape: f32[32,2], index: 1, kind: input, shape index: {}]
  %s2 = inlined_call_operand.vmem [shape: f32[1,2], index: 2, kind: input, shape index: {}]
  %s3 = inlined_call_operand.vmem [shape: f32[2,32], index: 3, kind: input, shape index: {}]
  %s4 = inlined_call_operand.vmem [shape: f32[1,32], index: 4, kind: input, shape index: {}]
  %s5 = inlined_call_operand.hbm [shape: f32[2,1,32], index: 5, kind: output, shape index: {}]
  %s6 = sld [smem:[#allocation0]]
  $region65: #{tpu_custom_call.1} parent=0
    _
  %s8 = ssub.s32 1, %s6
  %s9 = scalar_select 0, %s8, %s6
  $region1: #{tpu_custom_call.1} parent=0
    #allocation3 [shape = 'u8[65536]{0}', space=vmem, size = 0x10000, scoped, tag = 'input window, operand 0']
    #allocation4 [shape = 's32[2]{0}', space=sflag, size = 0x8, scoped, tag = 'scoped memory for tpu_custom_call.1']
    #allocation5 [shape = 's32[2]{0}', space=sflag, size = 0x8, scoped, tag = 'scoped memory for tpu_custom_call.1']
    #allocation6 [shape = 'u8[1024]{0}', space=vmem, size = 0x400, scoped, tag = 'output window, operand 0']
    %10 = vsyncpa [#allocation4], 0
    %s11 = scalar_lea.sflag [#allocation4], 1
    %12 = vsyncpa %s11, 0
    %13 = vsyncpa [#allocation5], 0
    %s14 = scalar_lea.sflag [#allocation5], 1
    %15 = vsyncpa %s14, 0
    loop: start=0, step=1, limit=4
    $region2: #{tpu_custom_call.1} parent=1 // loop_pre_header
      _
    $region3: #{tpu_custom_call.1} parent=1 // loop_header
      %s17 = sphi 0, %s21
      %p18 = scmp.ge.s32.totalorder %s17, 4
      %s24 = sphi 0, %s36
      %s25 = sphi 0, %s32
      %s26 = sphi 0, %s24
      %s27 = sphi 0, %s25
      %s28 = sphi 0, %s26
      %s29 = sphi 0, %s27
      %s41 = sphi 0, %s43
      %s44 = sphi 0, %s41
      %s45 = sphi 0, %s44
      %s61 = sphi 0, %s45
      %s65 = sphi 0, %s65
      %s67 = sphi 0, %s65
      %s68 = sphi 0, %s67
      %s82 = sphi 0, %s68
      %s86 = sphi 0, %s86
      %s88 = sphi 0, %s86
      %s89 = sphi 0, %s88
      %s103 = sphi 0, %s89
      %s107 = sphi 0, %s107
      %s109 = sphi 0, %s107
      %s110 = sphi 0, %s109
      %s124 = sphi 0, %s110
      %s128 = sphi 0, %s128
      %s130 = sphi 0, %s128
      %s131 = sphi 0, %s130
      %s145 = sphi 0, %s131
      %s151 = sphi 0, %s153
      %s154 = sphi 0, %s151
      %s155 = sphi 0, %s154
      %s171 = sphi 0, %s155
    $region4: #{tpu_custom_call.1} parent=1 // loop_header_branch
      %20 = sbr.rel (%p18) target = $region8
    $region5: #{tpu_custom_call.1} parent=1 // loop_body
      %s22 = ssub.s32 %s17, 1
      %s23 = ssub.s32 %s17, 2
      %s30 = sadd.s32 1, %s25
      %p31 = scmp.ge.s32.totalorder %s30, 1
      %s32 = scalar_select %p31, 0, %s30
      %s33 = sadd.s32 1, %s24
      %s34 = scalar_select %p31, %s33, %s24
      %p35 = scmp.ge.s32.totalorder %s34, 2
      %s36 = scalar_select %p35, 0, %s34
      %s37 = ssub.s32 %s24, %s36
      %s38 = ssub.s32 %s25, %s32
      %s39 = sor.u32 %s37, %s38
      %p40 = scmp.eq.s32.totalorder %s39, 0
      %s42 = sadd.s32 %s41, 1
      %s43 = scalar_select %p40, %s41, %s42
      %p46 = pneg %p40
      %p47 = scmp.eq.s32.totalorder %s17, 1
      %p48 = por %p46, %p47
      %p49 = scmp.ne.s32.totalorder %s41, %s44
      %p50 = scmp.eq.s32.totalorder %s17, 0
      %p51 = por %p49, %p50
      %p52 = scmp.ne.s32.totalorder %s41, %s44
      %p53 = scmp.eq.s32.totalorder %s22, 1
      %p54 = por %p52, %p53
      %p55 = scmp.ne.s32.totalorder %s44, %s45
      %p56 = scmp.eq.s32.totalorder %s22, 0
      %p57 = por %p55, %p56
      %p58 = scmp.ne.s32.totalorder %s44, %s45
      %p59 = scmp.eq.s32.totalorder %s23, 1
      %p60 = por %p58, %p59
      %p62 = scmp.ne.s32.totalorder %s45, %s61
      %p63 = scmp.eq.s32.totalorder %s23, 0
      %p64 = por %p62, %p63
      %s66 = sadd.s32 %s65, 1
      %p69 = scmp.eq.s32.totalorder %s17, 1
      %p70 = scmp.ne.s32.totalorder %s65, %s67
      %p71 = scmp.eq.s32.totalorder %s17, 0
      %p72 = por %p70, %p71
      %p73 = scmp.ne.s32.totalorder %s65, %s67
      %p74 = scmp.eq.s32.totalorder %s22, 1
      %p75 = por %p73, %p74
      %p76 = scmp.ne.s32.totalorder %s67, %s68
      %p77 = scmp.eq.s32.totalorder %s22, 0
      %p78 = por %p76, %p77
      %p79 = scmp.ne.s32.totalorder %s67, %s68
      %p80 = scmp.eq.s32.totalorder %s23, 1
      %p81 = por %p79, %p80
      %p83 = scmp.ne.s32.totalorder %s68, %s82
      %p84 = scmp.eq.s32.totalorder %s23, 0
      %p85 = por %p83, %p84
      %s87 = sadd.s32 %s86, 1
      %p90 = scmp.eq.s32.totalorder %s17, 1
      %p91 = scmp.ne.s32.totalorder %s86, %s88
      %p92 = scmp.eq.s32.totalorder %s17, 0
      %p93 = por %p91, %p92
      %p94 = scmp.ne.s32.totalorder %s86, %s88
      %p95 = scmp.eq.s32.totalorder %s22, 1
      %p96 = por %p94, %p95
      %p97 = scmp.ne.s32.totalorder %s88, %s89
      %p98 = scmp.eq.s32.totalorder %s22, 0
      %p99 = por %p97, %p98
      %p100 = scmp.ne.s32.totalorder %s88, %s89
      %p101 = scmp.eq.s32.totalorder %s23, 1
      %p102 = por %p100, %p101
      %p104 = scmp.ne.s32.totalorder %s89, %s103
      %p105 = scmp.eq.s32.totalorder %s23, 0
      %p106 = por %p104, %p105
      %s108 = sadd.s32 %s107, 1
      %p111 = scmp.eq.s32.totalorder %s17, 1
      %p112 = scmp.ne.s32.totalorder %s107, %s109
      %p113 = scmp.eq.s32.totalorder %s17, 0
      %p114 = por %p112, %p113
      %p115 = scmp.ne.s32.totalorder %s107, %s109
      %p116 = scmp.eq.s32.totalorder %s22, 1
      %p117 = por %p115, %p116
      %p118 = scmp.ne.s32.totalorder %s109, %s110
      %p119 = scmp.eq.s32.totalorder %s22, 0
      %p120 = por %p118, %p119
      %p121 = scmp.ne.s32.totalorder %s109, %s110
      %p122 = scmp.eq.s32.totalorder %s23, 1
      %p123 = por %p121, %p122
      %p125 = scmp.ne.s32.totalorder %s110, %s124
      %p126 = scmp.eq.s32.totalorder %s23, 0
      %p127 = por %p125, %p126
      %s129 = sadd.s32 %s128, 1
      %p132 = scmp.eq.s32.totalorder %s17, 1
      %p133 = scmp.ne.s32.totalorder %s128, %s130
      %p134 = scmp.eq.s32.totalorder %s17, 0
      %p135 = por %p133, %p134
      %p136 = scmp.ne.s32.totalorder %s128, %s130
      %p137 = scmp.eq.s32.totalorder %s22, 1
      %p138 = por %p136, %p137
      %p139 = scmp.ne.s32.totalorder %s130, %s131
      %p140 = scmp.eq.s32.totalorder %s22, 0
      %p141 = por %p139, %p140
      %p142 = scmp.ne.s32.totalorder %s130, %s131
      %p143 = scmp.eq.s32.totalorder %s23, 1
      %p144 = por %p142, %p143
      %p146 = scmp.ne.s32.totalorder %s131, %s145
      %p147 = scmp.eq.s32.totalorder %s23, 0
      %p148 = por %p146, %p147
      %s149 = ssub.s32 %s24, %s36
      %p150 = scmp.eq.s32.totalorder %s149, 0
      %s152 = sadd.s32 %s151, 1
      %s153 = scalar_select %p150, %s151, %s152
      %p156 = pneg %p150
      %p157 = scmp.eq.s32.totalorder %s17, 1
      %p158 = por %p156, %p157
      %p159 = scmp.ne.s32.totalorder %s151, %s154
      %p160 = scmp.eq.s32.totalorder %s17, 0
      %p161 = por %p159, %p160
      %p162 = scmp.ne.s32.totalorder %s151, %s154
      %p163 = scmp.eq.s32.totalorder %s22, 1
      %p164 = por %p162, %p163
      %p165 = scmp.ne.s32.totalorder %s154, %s155
      %p166 = scmp.eq.s32.totalorder %s22, 0
      %p167 = por %p165, %p166
      %p168 = scmp.ne.s32.totalorder %s154, %s155
      %p169 = scmp.eq.s32.totalorder %s23, 1
      %p170 = por %p168, %p169
      %p172 = scmp.ne.s32.totalorder %s155, %s171
      %p173 = scmp.eq.s32.totalorder %s23, 0
      %p174 = por %p172, %p173
      %p175 = scmp.le.s32.totalorder 1, %s17
      %p176 = scmp.lt.s32.totalorder %s17, 3
      %p177 = pnand %p175, %p176
      %p178 = pneg %p177
      // Predicated region
      $region9: #{tpu_custom_call.1} parent=5 // pred_check
        _
      $region10: #{tpu_custom_call.1} parent=5 // pred_check_branch
        %180 = sbr.rel (%p177) target = $region12
      $region11: #{tpu_custom_call.1} parent=5 // pred_region
        %s181 = ssub.s32 %s17, 1
        // Predicated region
        $region13: #{tpu_custom_call.1} parent=11 // pred_check
          %p182 = pneg %p78
        $region14: #{tpu_custom_call.1} parent=11 // pred_check_branch
          %184 = sbr.rel (%p182) target = $region16
        $region15: #{tpu_custom_call.1} parent=11 // pred_region
          _
        $region16: #{tpu_custom_call.1} parent=11 // pred_fallthru
          _
        // Predicated region
        $region17: #{tpu_custom_call.1} parent=11 // pred_check
          %p185 = pneg %p99
        $region18: #{tpu_custom_call.1} parent=11 // pred_check_branch
          %187 = sbr.rel (%p185) target = $region20
        $region19: #{tpu_custom_call.1} parent=11 // pred_region
          _
        $region20: #{tpu_custom_call.1} parent=11 // pred_fallthru
          _
        // Predicated region
        $region21: #{tpu_custom_call.1} parent=11 // pred_check
          %p188 = pneg %p120
        $region22: #{tpu_custom_call.1} parent=11 // pred_check_branch
          %190 = sbr.rel (%p188) target = $region24
        $region23: #{tpu_custom_call.1} parent=11 // pred_region
          _
        $region24: #{tpu_custom_call.1} parent=11 // pred_fallthru
          _
        // Predicated region
        $region25: #{tpu_custom_call.1} parent=11 // pred_check
          %p191 = pneg %p141
        $region26: #{tpu_custom_call.1} parent=11 // pred_check_branch
          %193 = sbr.rel (%p191) target = $region28
        $region27: #{tpu_custom_call.1} parent=11 // pred_region
          _
        $region28: #{tpu_custom_call.1} parent=11 // pred_fallthru
          _
      $region12: #{tpu_custom_call.1} parent=5 // pred_fallthru
        _
      %p194 = scmp.lt.s32.totalorder %s17, 2
      // Predicated region
      $region29: #{tpu_custom_call.1} parent=5 // pred_check
        %p195 = pneg %p194
      $region30: #{tpu_custom_call.1} parent=5 // pred_check_branch
        %197 = sbr.rel (%p195) target = $region32
      $region31: #{tpu_custom_call.1} parent=5 // pred_region
        // Predicated region
        $region33: #{tpu_custom_call.1} parent=31 // pred_check
          %p198 = pneg %p51
        $region34: #{tpu_custom_call.1} parent=31 // pred_check_branch
          %200 = sbr.rel (%p198) target = $region36
        $region35: #{tpu_custom_call.1} parent=31 // pred_region
          %s201 = sand.u32 %s41, 1
          %s202 = scalar_lea.sflag [#allocation4], %s201
          %s203 = sand.u32 %s41, 1
          %s204 = smul.addr %s203, 64
          %s205 = scalar_lea.vmem [#allocation3], %s204
          %s206 = smul.u32 2, %s25
          %s208 = ssub.s32 1024, 1024
          %209 = vsyncadd %s202, %s208
          %s210 = smul.addr %s24, 8
          %s211 = sadd.s32 %s206, %s210
          %s212 = smul.addr %s211, 128
          %s213 = scalar_lea.hbm %s0, %s212
          %s214 = sshll.u32 %s205, 4
          %s215 = int_to_ptr.vmem [resolvable:$true] %s214
          %220 = dma.hbm_to_vmem [thread:$0]  %s213, 1024, %s215, %s202, 256, 256, 16
        $region36: #{tpu_custom_call.1} parent=31 // pred_fallthru
          _
      $region32: #{tpu_custom_call.1} parent=5 // pred_fallthru
        _
      %p221 = scmp.le.s32.totalorder 1, %s17
      %p222 = scmp.lt.s32.totalorder %s17, 3
      %p223 = pnand %p221, %p222
      %p224 = pneg %p223
      // Predicated region
      $region37: #{tpu_custom_call.1} parent=5 // pred_check
        _
      $region38: #{tpu_custom_call.1} parent=5 // pred_check_branch
        %226 = sbr.rel (%p223) target = $region40
      $region39: #{tpu_custom_call.1} parent=5 // pred_region
        %s227 = ssub.s32 %s17, 1
        %s228 = sand.u32 %s44, 1
        %s229 = scalar_lea.sflag [#allocation4], %s228
        %s230 = sand.u32 %s44, 1
        %s231 = smul.addr %s230, 64
        %s232 = scalar_lea.vmem [#allocation3], %s231
        // Predicated region
        $region41: #{tpu_custom_call.1} parent=39 // pred_check
          %p233 = pneg %p57
        $region42: #{tpu_custom_call.1} parent=39 // pred_check_branch
          %235 = sbr.rel (%p233) target = $region44
        $region43: #{tpu_custom_call.1} parent=39 // pred_region
          %236 = dma.done %s229, 1024
        $region44: #{tpu_custom_call.1} parent=39 // pred_fallthru
          _
        %s237 = sand.u32 %s44, 1
        %s238 = scalar_lea.sflag [#allocation4], %s237
        %s239 = sand.u32 %s44, 1
        %s240 = smul.addr %s239, 64
        %s241 = scalar_lea.vmem [#allocation3], %s240
        %p242 = pneg %p57
        %p243 = pneg %p54
        %p244 = pneg %p78
        %p245 = pneg %p75
        %p246 = pneg %p99
        %p247 = pneg %p96
        %p248 = pneg %p120
        %p249 = pneg %p117
        %p250 = pneg %p141
        %p251 = pneg %p138
        %p252 = pneg %p167
        %p253 = pneg %p164
        %s254 = sand.u32 %s154, 1
        %s255 = scalar_lea.sflag [#allocation5], %s254
        %s256 = sand.u32 %s154, 1
        %s257 = scalar_lea.vmem [#allocation6], %s256
        %s258 = smul.u32 2, %s27
        %p259 = scmp.eq.s32.totalorder %s27, 0
        // Predicated region
        $region45: #{tpu_custom_call.1} parent=39 // pred_check
          %p260 = pneg %p259
        $region46: #{tpu_custom_call.1} parent=39 // pred_check_branch
          %262 = sbr.rel (%p260) target = $region48
        $region47: #{tpu_custom_call.1} parent=39 // pred_region
          %263 = vst [vmem:[#allocation2] sm:$0xff] 0.0
          %264 = vst [vmem:[#allocation2 + $0x8] sm:$0xff] 0.0
          %265 = vst [vmem:[#allocation2 + $0x10] sm:$0xff] 0.0
          %266 = vst [vmem:[#allocation2 + $0x18] sm:$0xff] 0.0
        $region48: #{tpu_custom_call.1} parent=39 // pred_fallthru
          _
        %v267 = vld [vmem:[%s232] sm:$0xff]
        %v268 = vld [vmem:[%s232 + $0x8] sm:$0xff]
        %v269 = vld [vmem:[%s232 + $0x10] sm:$0xff]
        %v270 = vld [vmem:[%s232 + $0x18] sm:$0xff]
        %v271 = vld [vmem:[%s232 + $0x20] sm:$0xff]
        %v272 = vld [vmem:[%s232 + $0x28] sm:$0xff]
        %v273 = vld [vmem:[%s232 + $0x30] sm:$0xff]
        %v274 = vld [vmem:[%s232 + $0x38] sm:$0xff]
        %v275 = vadd.f32 %v267, %v268
        %v276 = vadd.f32 %v269, %v270
        %v277 = vadd.f32 %v271, %v272
        %v278 = vadd.f32 %v273, %v274
        %v279 = vld [vmem:[#allocation2] sm:$0xff]
        %v280 = vld [vmem:[#allocation2 + $0x8] sm:$0xff]
        %v281 = vld [vmem:[#allocation2 + $0x10] sm:$0xff]
        %v282 = vld [vmem:[#allocation2 + $0x18] sm:$0xff]
        %v283 = vadd.f32 %v279, %v275
        %v284 = vadd.f32 %v280, %v276
        %v285 = vadd.f32 %v281, %v277
        %v286 = vadd.f32 %v282, %v278
        %287 = vst [vmem:[#allocation2] sm:$0xff] %v283
        %288 = vst [vmem:[#allocation2 + $0x8] sm:$0xff] %v284
        %289 = vst [vmem:[#allocation2 + $0x10] sm:$0xff] %v285
        %290 = vst [vmem:[#allocation2 + $0x18] sm:$0xff] %v286
        // Predicated region
        $region49: #{tpu_custom_call.1} parent=39 // pred_check
          %p291 = pneg %p259
        $region50: #{tpu_custom_call.1} parent=39 // pred_check_branch
          %293 = sbr.rel (%p291) target = $region52
        $region51: #{tpu_custom_call.1} parent=39 // pred_region
          %v294 = vld [vmem:[#allocation2] sm:$0xff]
          %v295 = vld [vmem:[#allocation2 + $0x8] sm:$0xff]
          %v296 = vld [vmem:[#allocation2 + $0x10] sm:$0xff]
          %v297 = vld [vmem:[#allocation2 + $0x18] sm:$0xff]
          %298 = vadd.xlane.f32.xlu0 %v294
          %v299 = vpop.xlane.xlu0 %298
          %300 = vadd.xlane.f32.xlu0 %v295
          %v301 = vpop.xlane.xlu0 %300
          %302 = vadd.xlane.f32.xlu0 %v296
          %v303 = vpop.xlane.xlu0 %302
          %304 = vadd.xlane.f32.xlu0 %v297
          %v305 = vpop.xlane.xlu0 %304
          %v306 = vmul.f32 %v299, 0.00390625
          %v307 = vmul.f32 %v301, 0.00390625
          %v308 = vmul.f32 %v303, 0.00390625
          %v309 = vmul.f32 %v305, 0.00390625
          %v310 = vld [vmem:[%s1] sm:$0xff]
          %v311 = vld [vmem:[%s1 + $0x8] sm:$0xff]
          %v312 = vld [vmem:[%s1 + $0x10] sm:$0xff]
          %v313 = vld [vmem:[%s1 + $0x18] sm:$0xff]
          %v314 = vld [vmem:[%s2] sm:$0x1]
          %v319 = vlaneseq
          %v320 = vand.u32 %v319, 127
          %v321 = vlaneseq
          %v322 = vshrl.u32 %v321, 7
          %v323 = vsub.s32 %v320, %v322
          %v324 = vrot.slane %v306, %v323
          %v325 = vadd.s32 %v320, 4294967288
          %v326 = vlaneseq
          %v327 = vshrl.u32 %v326, 7
          %v328 = vsub.s32 %v325, %v327
          %v329 = vrot.slane %v307, %v328
          %vm330 = vcmask 130112
          %v331 = vsel %vm330, %v329, %v324
          %v332 = vadd.s32 %v320, 4294967280
          %v333 = vlaneseq
          %v334 = vshrl.u32 %v333, 7
          %v335 = vsub.s32 %v332, %v334
          %v336 = vrot.slane %v308, %v335
          %vm337 = vcmask 195712
          %v338 = vsel %vm337, %v336, %v331
          %v339 = vadd.s32 %v320, 4294967272
          %v340 = vlaneseq
          %v341 = vshrl.u32 %v340, 7
          %v342 = vsub.s32 %v339, %v341
          %v343 = vrot.slane %v309, %v342
          %vm344 = vcmask 261312
          %v345 = vsel %vm344, %v343, %v338
          %vm346 = vcmask 261120
          %v347 = vsel %vm346, %v345, 0
          %349 = vmatprep.subr.mxu0 0.0
          %350 = vmatpush1.msra.mxu0 %v310
          %351 = vmatprep.subr.mxu0 0.0
          %352 = vmatpush1.msra.mxu0 %v311
          %353 = vmatprep.subr.mxu0 0.0
          %354 = vmatpush1.msra.mxu0 %v312
          %355 = vmatprep.subr.mxu0 0.0
          %356 = vmatpush1.msra.mxu0 %v313
          %357 = vmatprep.subr.mxu0 0.0
          %358 = vmatpush1.msra.mxu0 0.0
          %359 = vmatprep.subr.mxu0 0.0
          %360 = vmatpush1.msra.mxu0 0.0
          %361 = vmatprep.subr.mxu0 0.0
          %362 = vmatpush1.msra.mxu0 0.0
          %363 = vmatprep.subr.mxu0 0.0
          %364 = vmatpush1.msra.mxu0 0.0
          %365 = vmatprep.subr.mxu0 0.0
          %366 = vmatpush1.msra.mxu0 0.0
          %367 = vmatprep.subr.mxu0 0.0
          %368 = vmatpush1.msra.mxu0 0.0
          %369 = vmatprep.subr.mxu0 0.0
          %370 = vmatpush1.msra.mxu0 0.0
          %371 = vmatprep.subr.mxu0 0.0
          %372 = vmatpush1.msra.mxu0 0.0
          %373 = vmatprep.subr.mxu0 0.0
          %374 = vmatpush1.msra.mxu0 0.0
          %375 = vmatprep.subr.mxu0 0.0
          %376 = vmatpush1.msra.mxu0 0.0
          %377 = vmatprep.subr.mxu0 0.0
          %378 = vmatpush1.msra.mxu0 0.0
          %379 = vmatprep.subr.mxu0 0.0
          %380 = vmatpush1.msra.mxu0 0.0
          %381 = vmatprep.subr.mxu0 0.0
          %382 = vmatpush1.msra.mxu0 0.0
          %383 = vmatprep.subr.mxu0 0.0
          %384 = vmatpush1.msra.mxu0 0.0
          %385 = vmatprep.subr.mxu0 0.0
          %386 = vmatpush1.msra.mxu0 0.0
          %387 = vmatprep.subr.mxu0 0.0
          %388 = vmatpush1.msra.mxu0 0.0
          %389 = vmatprep.subr.mxu0 0.0
          %390 = vmatpush1.msra.mxu0 0.0
          %391 = vmatprep.subr.mxu0 0.0
          %392 = vmatpush1.msra.mxu0 0.0
          %393 = vmatprep.subr.mxu0 0.0
          %394 = vmatpush1.msra.mxu0 0.0
          %395 = vmatprep.subr.mxu0 0.0
          %396 = vmatpush1.msra.mxu0 0.0
          %397 = vmatprep.subr.mxu0 0.0
          %398 = vmatpush1.msra.mxu0 0.0
          %399 = vmatprep.subr.mxu0 0.0
          %400 = vmatpush1.msra.mxu0 0.0
          %401 = vmatprep.subr.mxu0 0.0
          %402 = vmatpush1.msra.mxu0 0.0
          %403 = vmatprep.subr.mxu0 0.0
          %404 = vmatpush1.msra.mxu0 0.0
          %405 = vmatprep.subr.mxu0 0.0
          %406 = vmatpush1.msra.mxu0 0.0
          %407 = vmatprep.subr.mxu0 0.0
          %408 = vmatpush1.msra.mxu0 0.0
          %409 = vmatprep.subr.mxu0 0.0
          %410 = vmatpush1.msra.mxu0 0.0
          %411 = vmatprep.subr.mxu0 0.0
          %412 = vmatpush1.msra.mxu0 0.0
          %413 = vmatprep.mubr.f32.mxu0 0.0
          %414 = vmatmul.mubr.f32.gmra.mrb[0].mxu0 %v347
          %v415 = vpop.f32.mrb[0].mxu0
          %v416 = vadd.f32 %v314, %v415
          %v417 = vpop.f32.mrb[0].mxu0
          %418 = vdwg.mxu0
          %v419 = vmax.f32 %v416, 0.0
          %v420 = vld [vmem:[%s3] sm:$0x3]
          %v421 = vld [vmem:[%s4] sm:$0x1]
          %vm422 = vcmask 15360
          %v424 = vsel %vm422, %v419, 0
          %vm426 = vcmask 1041408
          %v428 = vsel %vm426, %v420, 0
          %430 = vmatprep.subr.mxu0 0.0
          %431 = vmatpush1.msra.mxu0 %v428
          %432 = vmatprep.subr.mxu0 0.0
          %433 = vmatpush1.msra.mxu0 0.0
          %434 = vmatprep.subr.mxu0 0.0
          %435 = vmatpush1.msra.mxu0 0.0
          %436 = vmatprep.subr.mxu0 0.0
          %437 = vmatpush1.msra.mxu0 0.0
          %438 = vmatprep.subr.mxu0 0.0
          %439 = vmatpush1.msra.mxu0 0.0
          %440 = vmatprep.subr.mxu0 0.0
          %441 = vmatpush1.msra.mxu0 0.0
          %442 = vmatprep.subr.mxu0 0.0
          %443 = vmatpush1.msra.mxu0 0.0
          %444 = vmatprep.subr.mxu0 0.0
          %445 = vmatpush1.msra.mxu0 0.0
          %446 = vmatprep.subr.mxu0 0.0
          %447 = vmatpush1.msra.mxu0 0.0
          %448 = vmatprep.subr.mxu0 0.0
          %449 = vmatpush1.msra.mxu0 0.0
          %450 = vmatprep.subr.mxu0 0.0
          %451 = vmatpush1.msra.mxu0 0.0
          %452 = vmatprep.subr.mxu0 0.0
          %453 = vmatpush1.msra.mxu0 0.0
          %454 = vmatprep.subr.mxu0 0.0
          %455 = vmatpush1.msra.mxu0 0.0
          %456 = vmatprep.subr.mxu0 0.0
          %457 = vmatpush1.msra.mxu0 0.0
          %458 = vmatprep.subr.mxu0 0.0
          %459 = vmatpush1.msra.mxu0 0.0
          %460 = vmatprep.subr.mxu0 0.0
          %461 = vmatpush1.msra.mxu0 0.0
          %462 = vmatprep.subr.mxu0 0.0
          %463 = vmatpush1.msra.mxu0 0.0
          %464 = vmatprep.subr.mxu0 0.0
          %465 = vmatpush1.msra.mxu0 0.0
          %466 = vmatprep.subr.mxu0 0.0
          %467 = vmatpush1.msra.mxu0 0.0
          %468 = vmatprep.subr.mxu0 0.0
          %469 = vmatpush1.msra.mxu0 0.0
          %470 = vmatprep.subr.mxu0 0.0
          %471 = vmatpush1.msra.mxu0 0.0
          %472 = vmatprep.subr.mxu0 0.0
          %473 = vmatpush1.msra.mxu0 0.0
          %474 = vmatprep.subr.mxu0 0.0
          %475 = vmatpush1.msra.mxu0 0.0
          %476 = vmatprep.subr.mxu0 0.0
          %477 = vmatpush1.msra.mxu0 0.0
          %478 = vmatprep.subr.mxu0 0.0
          %479 = vmatpush1.msra.mxu0 0.0
          %480 = vmatprep.subr.mxu0 0.0
          %481 = vmatpush1.msra.mxu0 0.0
          %482 = vmatprep.subr.mxu0 0.0
          %483 = vmatpush1.msra.mxu0 0.0
          %484 = vmatprep.subr.mxu0 0.0
          %485 = vmatpush1.msra.mxu0 0.0
          %486 = vmatprep.subr.mxu0 0.0
          %487 = vmatpush1.msra.mxu0 0.0
          %488 = vmatprep.subr.mxu0 0.0
          %489 = vmatpush1.msra.mxu0 0.0
          %490 = vmatprep.subr.mxu0 0.0
          %491 = vmatpush1.msra.mxu0 0.0
          %492 = vmatprep.subr.mxu0 0.0
          %493 = vmatpush1.msra.mxu0 0.0
          %494 = vmatprep.mubr.f32.mxu0 0.0
          %495 = vmatmul.mubr.f32.gmra.mrb[0].mxu0 %v424
          %v496 = vpop.f32.mrb[0].mxu0
          %v497 = vadd.f32 %v421, %v496
          %v498 = vpop.f32.mrb[0].mxu0
          %499 = vdwg.mxu0
          %v500 = vxor.u32 %v497, 2147483648
          %v501 = vmul.f32 %v500, 1.442695
          %v502 = vpow.pop %v501
          %v503 = vadd.f32 %v502, 1.0
          %v504 = vrcp.pop %v503
          %v505 = vmul.f32 1.0, %v504
          %vm506 = vcmask 253952
          %507 = vst.msk [vmem:[%s257] sm:$0x1] %vm506, %v505
        $region52: #{tpu_custom_call.1} parent=39 // pred_fallthru
          _
        %s508 = sand.u32 %s154, 1
        %s509 = scalar_lea.sflag [#allocation5], %s508
        %s510 = sand.u32 %s154, 1
        %s511 = scalar_lea.vmem [#allocation6], %s510
        // Predicated region
        $region53: #{tpu_custom_call.1} parent=39 // pred_check
          %p512 = pneg %p164
        $region54: #{tpu_custom_call.1} parent=39 // pred_check_branch
          %514 = sbr.rel (%p512) target = $region56
        $region55: #{tpu_custom_call.1} parent=39 // pred_region
          %s516 = ssub.s32 16, 16
          %517 = vsyncadd %s509, %s516
          %s518 = smul.addr %s26, 16
          %s519 = scalar_lea.hbm %s5, %s518
          %s521 = sshll.u32 %s511, 4
          %s522 = int_to_ptr.vmem [resolvable:$true] %s521
          %524 = dma.vmem_to_hbm [thread:$0]  %s522, 16, %s519, %s509
        $region56: #{tpu_custom_call.1} parent=39 // pred_fallthru
          _
      $region40: #{tpu_custom_call.1} parent=5 // pred_fallthru
        _
      %p525 = scmp.le.s32.totalorder 2, %s17
      // Predicated region
      $region57: #{tpu_custom_call.1} parent=5 // pred_check
        %p526 = pneg %p525
      $region58: #{tpu_custom_call.1} parent=5 // pred_check_branch
        %528 = sbr.rel (%p526) target = $region60
      $region59: #{tpu_custom_call.1} parent=5 // pred_region
        %s529 = ssub.s32 %s17, 2
        // Predicated region
        $region61: #{tpu_custom_call.1} parent=59 // pred_check
          %p530 = pneg %p170
        $region62: #{tpu_custom_call.1} parent=59 // pred_check_branch
          %532 = sbr.rel (%p530) target = $region64
        $region63: #{tpu_custom_call.1} parent=59 // pred_region
          %s533 = sand.u32 %s155, 1
          %s534 = scalar_lea.sflag [#allocation5], %s533
          %s535 = sand.u32 %s155, 1
          %s536 = scalar_lea.vmem [#allocation6], %s535
          %537 = dma.done %s534, 16
        $region64: #{tpu_custom_call.1} parent=59 // pred_fallthru
          _
      $region60: #{tpu_custom_call.1} parent=5 // pred_fallthru
        _
    $region6: #{tpu_custom_call.1} parent=1 // loop_footer
      %s21 = sadd.s32 1, %s17
    $region7: #{tpu_custom_call.1} parent=1 // loop_footer_branch
      %16 = sbr.rel target = $region3
    $region8: #{tpu_custom_call.1} parent=1 // loop_exit
      _
    %538 = vsyncpa [#allocation4], 1
    %s539 = scalar_lea.sflag [#allocation4], 1
    %540 = vsyncpa %s539, 1
    %541 = vsyncpa [#allocation5], 1
    %s542 = scalar_lea.sflag [#allocation5], 1
    %543 = vsyncpa %s542, 1

</llo_original>
